<compile_context>
chip_gen: v7x
topology: tpu7x:2x2x1
jax: 0.10.0
libtpu: 0.0.40
codegen_flags: <defaults>
</compile_context>

<pallas_src>
import functools

import jax
import jax.numpy as jnp
from jax import lax
from jax.experimental import pallas as pl
from jax.experimental.pallas import tpu as pltpu


# ----------------------------------------------------------------------------
# Kernels
# ----------------------------------------------------------------------------

def _ffn_resident_kernel(x_ref, w1_ref, b1_ref, w2_ref, b2_ref, o_ref):
    """Weight-resident path: whole hidden dim in one shot, 1-D grid over rows.

    x_ref : (tm, C)   w1_ref: (Hid, C)   b1_ref: (1, Hid)
    w2_ref: (C, Hid)  b2_ref: (1, C)     o_ref : (tm, C)
    """
    # h = x @ W1^T + b1   (contract over C; W1 stays in native (Hid, C) layout)
    h = lax.dot_general(
        x_ref[...], w1_ref[...],
        dimension_numbers=(((1,), (1,)), ((), ())),
        preferred_element_type=jnp.float32)
    h = jnp.maximum(h + b1_ref[...].astype(jnp.float32), 0.0)
    # y = h @ W2^T + b2   (contract over Hid; W2 stays in native (C, Hid) layout)
    y = lax.dot_general(
        h.astype(w2_ref.dtype), w2_ref[...],
        dimension_numbers=(((1,), (1,)), ((), ())),
        preferred_element_type=jnp.float32)
    # TODO(synk): nn.Dropout(0.2) omitted (eval-mode identity); torch RNG not
    # reproducible in-kernel.
    o_ref[...] = (y + b2_ref[...].astype(jnp.float32)).astype(o_ref.dtype)


def _ffn_tiled_kernel(x_ref, w1_ref, b1_ref, w2_ref, b2_ref, o_ref, acc_ref, *, th):
    """Hidden-tiled path: reduction axis last, resident f32 accumulator.

    x_ref : (tm, C)   w1_ref: (th, C)    b1_ref: (1, Hid) [full, sliced in-kernel]
    w2_ref: (C, th)   b2_ref: (1, C)     o_ref : (tm, C)  acc_ref: (tm, C) f32
    """
    j = pl.program_id(1)

    @pl.when(j == 0)
    def _():
        acc_ref[...] = jnp.zeros_like(acc_ref)

    h = lax.dot_general(
        x_ref[...], w1_ref[...],
        dimension_numbers=(((1,), (1,)), ((), ())),
        preferred_element_type=jnp.float32)
    b1_tile = b1_ref[:, pl.ds(pl.multiple_of(j * th, 128), th)]
    h = jnp.maximum(h + b1_tile.astype(jnp.float32), 0.0)

    acc_ref[...] += lax.dot_general(
        h.astype(w2_ref.dtype), w2_ref[...],
        dimension_numbers=(((1,), (1,)), ((), ())),
        preferred_element_type=jnp.float32)

    @pl.when(j == pl.num_programs(1) - 1)
    def _():
        # TODO(synk): nn.Dropout(0.2) omitted (eval-mode identity).
        o_ref[...] = (acc_ref[...] + b2_ref[...].astype(jnp.float32)).astype(o_ref.dtype)


# ----------------------------------------------------------------------------
# VMEM-aware planning
# ----------------------------------------------------------------------------

def _vmem_capacity_bytes():
    try:
        return int(pltpu.get_tpu_info().vmem_capacity_bytes)
    except Exception:
        return 64 * 1024 * 1024  # conservative: v7x per-TensorCore VMEM


def _resident_vmem_bytes(tm, C, Hid, in_sz, w_sz, out_sz):
    b = 2 * tm * C * in_sz            # x tile, double-buffered
    b += 2 * tm * C * out_sz          # out tile
    b += 2 * Hid * C * w_sz           # W1 (native layout), budget 2 buffers
    b += 2 * C * Hid * w_sz           # W2
    b += 2 * (Hid + C) * w_sz         # biases
    b += tm * Hid * (4 + w_sz)        # f32 hidden temp + cast for 2nd matmul
    b += tm * C * 4                   # f32 pre-store temp
    return b


def _tiled_vmem_bytes(tm, th, C, Hid, in_sz, w_sz, out_sz):
    b = 2 * tm * C * in_sz
    b += 2 * tm * C * out_sz
    b += 2 * th * C * w_sz            # W1 hidden slice
    b += 2 * C * th * w_sz            # W2 hidden slice
    b += 2 * Hid * w_sz + 2 * C * w_sz
    b += tm * C * 4                   # accumulator scratch
    b += tm * th * (4 + w_sz)         # f32 hidden temp + cast
    return b


def _choose_plan(M, C, Hid, block_m, block_h, budget, in_sz, w_sz, out_sz,
                 force_tiled):
    # Row-tile candidates: multiples of 8 that divide M, largest first.
    start_m = max((min(block_m, M) // 8) * 8, 8)
    tm_cands = [t for t in range(start_m, 7, -8) if M % t == 0]
    if not tm_cands:
        raise ValueError(f"no row tile (multiple of 8) divides M={M}")
    # Prefer >= 2 row tiles so the 'parallel' axis can shard across TensorCores
    # (v7x has 2 TCs/chip); fall back to a single tile only if unavoidable.
    pref = [t for t in tm_cands if M // t >= 2] or tm_cands

    # Path A: full weight residency (hidden axis not tiled).
    if not force_tiled:
        for tm in pref:
            if _resident_vmem_bytes(tm, C, Hid, in_sz, w_sz, out_sz) <= budget:
                return "resident", tm, Hid

    # Path B: hidden-tiled with resident accumulator.
    th_align = 256 if Hid % 256 == 0 else 128
    start_h = max((min(block_h, Hid) // th_align) * th_align, th_align)
    th_cands = [t for t in range(start_h, th_align - 1, -th_align) if Hid % t == 0]
    for tm in pref:
        for th in th_cands:
            if _tiled_vmem_bytes(tm, th, C, Hid, in_sz, w_sz, out_sz) <= budget:
                return "tiled", tm, th

    raise ValueError(
        f"FeedForward kernel: no tiling of (M={M}, C={C}, Hid={Hid}) fits the "
        f"VMEM budget of {budget} bytes; reduce block sizes or use smaller dtypes.")


# ----------------------------------------------------------------------------
# Wrapper
# ----------------------------------------------------------------------------

def feedforward_forward(x, w1, b1, w2, b2, *, block_m=1024, block_h=1024,
                        force_tiled=False):
    """x: (B, T, C); torch-layout params w1: (4C, C), b1: (4C,), w2: (C, 4C),
    b2: (C,).  Returns (B, T, C).  Dropout is eval-mode identity."""
    B, T, C = x.shape
    Hid = w1.shape[0]
    assert w1.shape == (Hid, C), w1.shape
    assert w2.shape == (C, Hid), w2.shape
    assert b1.shape == (Hid,) and b2.shape == (C,)

    M = B * T
    assert M % 8 == 0, f"B*T={M} must be a multiple of 8"
    assert C % 128 == 0, f"n_embd={C} must be a multiple of 128"
    assert Hid % 128 == 0, f"hidden={Hid} must be a multiple of 128"

    x2d = x.reshape(M, C)                 # free (contiguous)
    b1_2d = b1.reshape(1, Hid)
    b2_2d = b2.reshape(1, C)

    in_sz = jnp.dtype(x.dtype).itemsize
    w_sz = jnp.dtype(w1.dtype).itemsize
    out_sz = in_sz

    vmem_cap = _vmem_capacity_bytes()
    budget = min(int(vmem_cap * 0.75), 112 * 1024 * 1024)

    mode, tm, th = _choose_plan(M, C, Hid, block_m, block_h, budget,
                                in_sz, w_sz, out_sz, force_tiled)

    flops = 4 * M * C * Hid               # two matmuls, 2 FLOP/MAC each
    bytes_accessed = (2 * M * C * in_sz       # x in + y out
                      + 2 * Hid * C * w_sz    # W1 + W2
                      + (Hid + C) * w_sz)     # biases
    cost = pl.CostEstimate(flops=flops, transcendentals=0,
                           bytes_accessed=int(bytes_accessed))

    if mode == "resident":
        grid_spec = pltpu.PrefetchScalarGridSpec(
            num_scalar_prefetch=0,
            grid=(M // tm,),
            in_specs=[
                pl.BlockSpec((tm, C), lambda i: (i, 0)),     # x row tile
                pl.BlockSpec((Hid, C), lambda i: (0, 0)),    # W1: DMA'd once
                pl.BlockSpec((1, Hid), lambda i: (0, 0)),    # b1: resident
                pl.BlockSpec((C, Hid), lambda i: (0, 0)),    # W2: DMA'd once
                pl.BlockSpec((1, C), lambda i: (0, 0)),      # b2: resident
            ],
            out_specs=pl.BlockSpec((tm, C), lambda i: (i, 0)),
        )
        kernel = _ffn_resident_kernel
        dim_sem = ("parallel",)
    else:
        grid_spec = pltpu.PrefetchScalarGridSpec(
            num_scalar_prefetch=0,
            grid=(M // tm, Hid // th),
            in_specs=[
                pl.BlockSpec((tm, C), lambda i, j: (i, 0)),   # x: resident over hidden
                pl.BlockSpec((th, C), lambda i, j: (j, 0)),   # W1 hidden slice (native layout)
                pl.BlockSpec((1, Hid), lambda i, j: (0, 0)),  # b1: full, sliced in-kernel
                pl.BlockSpec((C, th), lambda i, j: (0, j)),   # W2 hidden slice (native layout)
                pl.BlockSpec((1, C), lambda i, j: (0, 0)),    # b2: resident
            ],
            out_specs=pl.BlockSpec((tm, C), lambda i, j: (i, 0)),
            scratch_shapes=[pltpu.VMEM((tm, C), jnp.float32)],
        )
        kernel = functools.partial(_ffn_tiled_kernel, th=th)
        dim_sem = ("parallel", "arbitrary")

    out2d = pl.pallas_call(
        kernel,
        out_shape=jax.ShapeDtypeStruct((M, C), x.dtype),
        grid_spec=grid_spec,
        compiler_params=pltpu.CompilerParams(
            dimension_semantics=dim_sem,
            vmem_limit_bytes=budget,
        ),
        cost_estimate=cost,
    )(x2d, w1, b1_2d, w2, b2_2d)

    return out2d.reshape(B, T, C)


def feedforward_reference(x, w1, b1, w2, b2):
    """Pure-JAX reference mirroring the PyTorch forward (dropout in eval mode)."""
    h = jnp.maximum(x @ w1.T + b1, 0.0)
    return h @ w2.T + b2


if __name__ == "__main__":
    # Small shapes consistent with the module's forward (scaled-down n_embd).
    B, T = 2, 8
    n_embd = 128
    hidden = 4 * n_embd  # 512

    key = jax.random.PRNGKey(0)
    kx, k1, kb1, k2, kb2 = jax.random.split(key, 5)

    x = jax.random.normal(kx, (B, T, n_embd), dtype=jnp.float32)

    # nn.Linear default init: U(-1/sqrt(fan_in), 1/sqrt(fan_in))
    bound1 = 1.0 / (n_embd ** 0.5)
    w1 = jax.random.uniform(k1, (hidden, n_embd), jnp.float32, -bound1, bound1)
    b1 = jax.random.uniform(kb1, (hidden,), jnp.float32, -bound1, bound1)
    bound2 = 1.0 / (hidden ** 0.5)
    w2 = jax.random.uniform(k2, (n_embd, hidden), jnp.float32, -bound2, bound2)
    b2 = jax.random.uniform(kb2, (n_embd,), jnp.float32, -bound2, bound2)

    ref = feedforward_reference(x, w1, b1, w2, b2)

    # 1) Auto plan: weight-resident path (weights DMA'd once, 1-D grid).
    out_res = feedforward_forward(x, w1, b1, w2, b2)
    out_res = jax.block_until_ready(out_res)
    assert out_res.shape == (B, T, n_embd)
    assert jnp.allclose(out_res, ref, atol=1e-4, rtol=1e-4), "resident path mismatch"

    # 2) Forced hidden-tiled path (exercises accumulator init/finalize + b1 slicing).
    out_tiled = feedforward_forward(x, w1, b1, w2, b2,
                                    block_m=8, block_h=256, force_tiled=True)
    out_tiled = jax.block_until_ready(out_tiled)
    assert jnp.allclose(out_tiled, ref, atol=1e-4, rtol=1e-4), "tiled path mismatch"

    print("KERNEL_OK")
</pallas_src>

<mosaic_0001>
module attributes {stable_mosaic.version = 11 : i64} {
  func.func @_ffn_resident_kernel(%arg0: i32, %arg1: memref<8x128xf32, #tpu.memory_space<vmem>>, %arg2: memref<512x128xf32, #tpu.memory_space<vmem>>, %arg3: memref<1x512xf32, #tpu.memory_space<vmem>>, %arg4: memref<128x512xf32, #tpu.memory_space<vmem>>, %arg5: memref<1x128xf32, #tpu.memory_space<vmem>>, %arg6: memref<8x128xf32, #tpu.memory_space<vmem>>) attributes {dimension_semantics = [#tpu.dimension_semantics<parallel>], iteration_bounds = array<i64: 2>, scalar_prefetch = 0 : i64, scratch_operands = 0 : i64, tpu.core_type = #tpu.core_type<tc>, window_params = [{transform_indices = @transform_0, window_bounds = array<i64: 8, 128>}, {pipeline_mode = #tpu.pipeline_mode<synchronous>, transform_indices = @transform_1, window_bounds = array<i64: 512, 128>}, {pipeline_mode = #tpu.pipeline_mode<synchronous>, transform_indices = @transform_2, window_bounds = array<i64: 1, 512>}, {pipeline_mode = #tpu.pipeline_mode<synchronous>, transform_indices = @transform_3, window_bounds = array<i64: 128, 512>}, {pipeline_mode = #tpu.pipeline_mode<synchronous>, transform_indices = @transform_4, window_bounds = array<i64: 1, 128>}, {transform_indices = @transform_5, window_bounds = array<i64: 8, 128>}]} {
    %c0 = arith.constant 0 : index
    %c0_0 = arith.constant 0 : index
    %0 = vector.load %arg1[%c0, %c0_0] : memref<8x128xf32, #tpu.memory_space<vmem>>, vector<8x128xf32>
    %c0_1 = arith.constant 0 : index
    %c0_2 = arith.constant 0 : index
    %1 = vector.load %arg2[%c0_1, %c0_2] : memref<512x128xf32, #tpu.memory_space<vmem>>, vector<512x128xf32>
    %cst = arith.constant dense<0.000000e+00> : vector<8x512xf32>
    %2 = tpu.matmul %0, %1, %cst {dimension_numbers = #tpu.dot_dimension_numbers<[1], [1], [0], [0], [0, 0, 1, 0], [], []>} : vector<8x128xf32>, vector<512x128xf32>, vector<8x512xf32> -> vector<8x512xf32>
    %c0_3 = arith.constant 0 : index
    %c0_4 = arith.constant 0 : index
    %3 = vector.load %arg3[%c0_3, %c0_4] : memref<1x512xf32, #tpu.memory_space<vmem>>, vector<1x512xf32>
    %4 = vector.broadcast %3 : vector<1x512xf32> to vector<8x512xf32>
    %5 = arith.addf %2, %4 : vector<8x512xf32>
    %cst_5 = arith.constant 0.000000e+00 : f32
    %6 = vector.broadcast %cst_5 : f32 to vector<8x512xf32>
    %7 = arith.maximumf %5, %6 : vector<8x512xf32>
    %c0_6 = arith.constant 0 : index
    %c0_7 = arith.constant 0 : index
    %8 = vector.load %arg4[%c0_6, %c0_7] : memref<128x512xf32, #tpu.memory_space<vmem>>, vector<128x512xf32>
    %cst_8 = arith.constant dense<0.000000e+00> : vector<8x128xf32>
    %9 = tpu.matmul %7, %8, %cst_8 {dimension_numbers = #tpu.dot_dimension_numbers<[1], [1], [0], [0], [0, 0, 1, 0], [], []>} : vector<8x512xf32>, vector<128x512xf32>, vector<8x128xf32> -> vector<8x128xf32>
    %c0_9 = arith.constant 0 : index
    %c0_10 = arith.constant 0 : index
    %10 = vector.load %arg5[%c0_9, %c0_10] : memref<1x128xf32, #tpu.memory_space<vmem>>, vector<1x128xf32>
    %11 = vector.broadcast %10 : vector<1x128xf32> to vector<8x128xf32>
    %12 = arith.addf %9, %11 : vector<8x128xf32>
    %c0_11 = arith.constant 0 : index
    %c0_12 = arith.constant 0 : index
    %13 = vector.load %arg6[%c0_11, %c0_12] : memref<8x128xf32, #tpu.memory_space<vmem>>, vector<8x128xf32>
    tpu.vector_store %arg6[%c0_11, %c0_12], %12 {strides = array<i32>} : memref<8x128xf32, #tpu.memory_space<vmem>>, vector<8x128xf32>,
    return
  }
  func.func @transform_0(%arg0: i32) -> (i32, i32) {
    %c0_i32 = arith.constant 0 : i32
    %c0_i32_0 = arith.constant 0 : i32
    return %arg0, %c0_i32 : i32, i32
  }
  func.func @transform_1(%arg0: i32) -> (i32, i32) {
    %c0_i32 = arith.constant 0 : i32
    %c0_i32_0 = arith.constant 0 : i32
    %c0_i32_1 = arith.constant 0 : i32
    return %c0_i32, %c0_i32_0 : i32, i32
  }
  func.func @transform_2(%arg0: i32) -> (i32, i32) {
    %c0_i32 = arith.constant 0 : i32
    %c0_i32_0 = arith.constant 0 : i32
    %c0_i32_1 = arith.constant 0 : i32
    return %c0_i32, %c0_i32_0 : i32, i32
  }
  func.func @transform_3(%arg0: i32) -> (i32, i32) {
    %c0_i32 = arith.constant 0 : i32
    %c0_i32_0 = arith.constant 0 : i32
    %c0_i32_1 = arith.constant 0 : i32
    return %c0_i32, %c0_i32_0 : i32, i32
  }
  func.func @transform_4(%arg0: i32) -> (i32, i32) {
    %c0_i32 = arith.constant 0 : i32
    %c0_i32_0 = arith.constant 0 : i32
    %c0_i32_1 = arith.constant 0 : i32
    return %c0_i32, %c0_i32_0 : i32, i32
  }
  func.func @transform_5(%arg0: i32) -> (i32, i32) {
    %c0_i32 = arith.constant 0 : i32
    %c0_i32_0 = arith.constant 0 : i32
    return %arg0, %c0_i32 : i32, i32
  }
}

</mosaic_0001>

<llo_original>
// kernel: tpu_custom_call.1
$region0: #{tpu_custom_call.1}
  #allocation0 [shape = 'u32[]', space=smem, size = 0x4, offset = 0x4, fixed_abs, tag = 'smem constant byte address 0x4 - core index']
  #allocation1 [shape = 'u32[144,128]{1,0:T(1,128)}', space=vmem, size = 0x12000, scoped, tag = 'internal scratch']
  %s0 = inlined_call_operand.hbm [shape: f32[16,128], index: 0, kind: input, shape index: {}]
  %s1 = inlined_call_operand.hbm [shape: f32[512,128], index: 1, kind: input, shape index: {}]
  %s2 = inlined_call_operand.vmem [shape: f32[1,512], index: 2, kind: input, shape index: {}]
  %s3 = inlined_call_operand.hbm [shape: f32[128,512], index: 3, kind: input, shape index: {}]
  %s4 = inlined_call_operand.vmem [shape: f32[1,128], index: 4, kind: input, shape index: {}]
  %s5 = inlined_call_operand.hbm [shape: f32[16,128], index: 5, kind: output, shape index: {}]
  %s6 = sld [smem:[#allocation0]]
  $region65: #{tpu_custom_call.1} parent=0
    _
  %s8 = ssub.s32 1, %s6
  %s9 = scalar_select 0, %s8, %s6
  $region1: #{tpu_custom_call.1} parent=0
    #allocation2 [shape = 'u8[8192]{0}', space=vmem, size = 0x2000, scoped, tag = 'input window, operand 0']
    #allocation3 [shape = 's32[2]{0}', space=sflag, size = 0x8, scoped, tag = 'scoped memory for tpu_custom_call.1']
    #allocation4 [shape = 's32[2]{0}', space=sflag, size = 0x8, scoped, tag = 'scoped memory for tpu_custom_call.1']
    #allocation5 [shape = 'u8[262144]{0}', space=vmem, size = 0x40000, scoped, tag = 'input window, operand 1, single buffered']
    #allocation6 [shape = 's32[1]{0}', space=sflag, size = 0x4, scoped, tag = 'scoped memory for tpu_custom_call.1']
    #allocation7 [shape = 'u8[262144]{0}', space=vmem, size = 0x40000, scoped, tag = 'input window, operand 3, single buffered']
    #allocation8 [shape = 'u8[8192]{0}', space=vmem, size = 0x2000, scoped, tag = 'output window, operand 0']
    %10 = vsyncpa [#allocation3], 0
    %s11 = scalar_lea.sflag [#allocation3], 1
    %12 = vsyncpa %s11, 0
    %13 = vsyncpa [#allocation6], 0
    %14 = vsyncpa [#allocation4], 0
    %s15 = scalar_lea.sflag [#allocation4], 1
    %16 = vsyncpa %s15, 0
    loop: start=0, step=1, limit=4
    $region2: #{tpu_custom_call.1} parent=1 // loop_pre_header
      _
    $region3: #{tpu_custom_call.1} parent=1 // loop_header
      %s18 = sphi 0, %s22
      %p19 = scmp.ge.s32.totalorder %s18, 4
      %s28 = sphi 0, %s30
      %s31 = sphi 0, %s28
      %s32 = sphi 0, %s31
      %s48 = sphi 0, %s32
      %s52 = sphi 0, %s52
      %s54 = sphi 0, %s52
      %s55 = sphi 0, %s54
      %s69 = sphi 0, %s55
      %s73 = sphi 0, %s73
      %s75 = sphi 0, %s73
      %s76 = sphi 0, %s75
      %s90 = sphi 0, %s76
      %s94 = sphi 0, %s94
      %s96 = sphi 0, %s94
      %s97 = sphi 0, %s96
      %s111 = sphi 0, %s97
      %s115 = sphi 0, %s115
      %s117 = sphi 0, %s115
      %s118 = sphi 0, %s117
      %s132 = sphi 0, %s118
      %s138 = sphi 0, %s140
      %s141 = sphi 0, %s138
      %s142 = sphi 0, %s141
      %s158 = sphi 0, %s142
    $region4: #{tpu_custom_call.1} parent=1 // loop_header_branch
      %21 = sbr.rel (%p19) target = $region8
    $region5: #{tpu_custom_call.1} parent=1 // loop_body
      %s23 = ssub.s32 %s18, 1
      %s24 = ssub.s32 %s18, 2
      %s25 = sadd.s32 %s18, 1
      %s26 = ssub.s32 %s18, %s25
      %p27 = scmp.eq.s32.totalorder %s26, 0
      %s29 = sadd.s32 %s28, 1
      %s30 = scalar_select %p27, %s28, %s29
      %p33 = pneg %p27
      %p34 = scmp.eq.s32.totalorder %s18, 1
      %p35 = por %p33, %p34
      %p36 = scmp.ne.s32.totalorder %s28, %s31
      %p37 = scmp.eq.s32.totalorder %s18, 0
      %p38 = por %p36, %p37
      %p39 = scmp.ne.s32.totalorder %s28, %s31
      %p40 = scmp.eq.s32.totalorder %s23, 1
      %p41 = por %p39, %p40
      %p42 = scmp.ne.s32.totalorder %s31, %s32
      %p43 = scmp.eq.s32.totalorder %s23, 0
      %p44 = por %p42, %p43
      %p45 = scmp.ne.s32.totalorder %s31, %s32
      %p46 = scmp.eq.s32.totalorder %s24, 1
      %p47 = por %p45, %p46
      %p49 = scmp.ne.s32.totalorder %s32, %s48
      %p50 = scmp.eq.s32.totalorder %s24, 0
      %p51 = por %p49, %p50
      %s53 = sadd.s32 %s52, 1
      %p56 = scmp.eq.s32.totalorder %s18, 1
      %p57 = scmp.ne.s32.totalorder %s52, %s54
      %p58 = scmp.eq.s32.totalorder %s18, 0
      %p59 = por %p57, %p58
      %p60 = scmp.ne.s32.totalorder %s52, %s54
      %p61 = scmp.eq.s32.totalorder %s23, 1
      %p62 = por %p60, %p61
      %p63 = scmp.ne.s32.totalorder %s54, %s55
      %p64 = scmp.eq.s32.totalorder %s23, 0
      %p65 = por %p63, %p64
      %p66 = scmp.ne.s32.totalorder %s54, %s55
      %p67 = scmp.eq.s32.totalorder %s24, 1
      %p68 = por %p66, %p67
      %p70 = scmp.ne.s32.totalorder %s55, %s69
      %p71 = scmp.eq.s32.totalorder %s24, 0
      %p72 = por %p70, %p71
      %s74 = sadd.s32 %s73, 1
      %p77 = scmp.eq.s32.totalorder %s18, 1
      %p78 = scmp.ne.s32.totalorder %s73, %s75
      %p79 = scmp.eq.s32.totalorder %s18, 0
      %p80 = por %p78, %p79
      %p81 = scmp.ne.s32.totalorder %s73, %s75
      %p82 = scmp.eq.s32.totalorder %s23, 1
      %p83 = por %p81, %p82
      %p84 = scmp.ne.s32.totalorder %s75, %s76
      %p85 = scmp.eq.s32.totalorder %s23, 0
      %p86 = por %p84, %p85
      %p87 = scmp.ne.s32.totalorder %s75, %s76
      %p88 = scmp.eq.s32.totalorder %s24, 1
      %p89 = por %p87, %p88
      %p91 = scmp.ne.s32.totalorder %s76, %s90
      %p92 = scmp.eq.s32.totalorder %s24, 0
      %p93 = por %p91, %p92
      %s95 = sadd.s32 %s94, 1
      %p98 = scmp.eq.s32.totalorder %s18, 1
      %p99 = scmp.ne.s32.totalorder %s94, %s96
      %p100 = scmp.eq.s32.totalorder %s18, 0
      %p101 = por %p99, %p100
      %p102 = scmp.ne.s32.totalorder %s94, %s96
      %p103 = scmp.eq.s32.totalorder %s23, 1
      %p104 = por %p102, %p103
      %p105 = scmp.ne.s32.totalorder %s96, %s97
      %p106 = scmp.eq.s32.totalorder %s23, 0
      %p107 = por %p105, %p106
      %p108 = scmp.ne.s32.totalorder %s96, %s97
      %p109 = scmp.eq.s32.totalorder %s24, 1
      %p110 = por %p108, %p109
      %p112 = scmp.ne.s32.totalorder %s97, %s111
      %p113 = scmp.eq.s32.totalorder %s24, 0
      %p114 = por %p112, %p113
      %s116 = sadd.s32 %s115, 1
      %p119 = scmp.eq.s32.totalorder %s18, 1
      %p120 = scmp.ne.s32.totalorder %s115, %s117
      %p121 = scmp.eq.s32.totalorder %s18, 0
      %p122 = por %p120, %p121
      %p123 = scmp.ne.s32.totalorder %s115, %s117
      %p124 = scmp.eq.s32.totalorder %s23, 1
      %p125 = por %p123, %p124
      %p126 = scmp.ne.s32.totalorder %s117, %s118
      %p127 = scmp.eq.s32.totalorder %s23, 0
      %p128 = por %p126, %p127
      %p129 = scmp.ne.s32.totalorder %s117, %s118
      %p130 = scmp.eq.s32.totalorder %s24, 1
      %p131 = por %p129, %p130
      %p133 = scmp.ne.s32.totalorder %s118, %s132
      %p134 = scmp.eq.s32.totalorder %s24, 0
      %p135 = por %p133, %p134
      %s136 = ssub.s32 %s18, %s25
      %p137 = scmp.eq.s32.totalorder %s136, 0
      %s139 = sadd.s32 %s138, 1
      %s140 = scalar_select %p137, %s138, %s139
      %p143 = pneg %p137
      %p144 = scmp.eq.s32.totalorder %s18, 1
      %p145 = por %p143, %p144
      %p146 = scmp.ne.s32.totalorder %s138, %s141
      %p147 = scmp.eq.s32.totalorder %s18, 0
      %p148 = por %p146, %p147
      %p149 = scmp.ne.s32.totalorder %s138, %s141
      %p150 = scmp.eq.s32.totalorder %s23, 1
      %p151 = por %p149, %p150
      %p152 = scmp.ne.s32.totalorder %s141, %s142
      %p153 = scmp.eq.s32.totalorder %s23, 0
      %p154 = por %p152, %p153
      %p155 = scmp.ne.s32.totalorder %s141, %s142
      %p156 = scmp.eq.s32.totalorder %s24, 1
      %p157 = por %p155, %p156
      %p159 = scmp.ne.s32.totalorder %s142, %s158
      %p160 = scmp.eq.s32.totalorder %s24, 0
      %p161 = por %p159, %p160
      %p162 = scmp.le.s32.totalorder 1, %s18
      %p163 = scmp.lt.s32.totalorder %s18, 3
      %p164 = pnand %p162, %p163
      %p165 = pneg %p164
      // Predicated region
      $region9: #{tpu_custom_call.1} parent=5 // pred_check
        _
      $region10: #{tpu_custom_call.1} parent=5 // pred_check_branch
        %167 = sbr.rel (%p164) target = $region12
      $region11: #{tpu_custom_call.1} parent=5 // pred_region
        %s168 = ssub.s32 %s18, 1
        // Predicated region
        $region13: #{tpu_custom_call.1} parent=11 // pred_check
          %p169 = pneg %p65
        $region14: #{tpu_custom_call.1} parent=11 // pred_check_branch
          %171 = sbr.rel (%p169) target = $region16
        $region15: #{tpu_custom_call.1} parent=11 // pred_region
          %s173 = ssub.s32 8192, 8192
          %174 = vsyncadd [#allocation6], %s173
          %s175 = sshll.u32 [#allocation5], 4
          %s176 = int_to_ptr.vmem [resolvable:$true] %s175
          %181 = dma.hbm_to_vmem [thread:$0]  %s1, 8192, %s176, [#allocation6], 128, 128, 8
        $region16: #{tpu_custom_call.1} parent=11 // pred_fallthru
          _
        // Predicated region
        $region17: #{tpu_custom_call.1} parent=11 // pred_check
          %p182 = pneg %p86
        $region18: #{tpu_custom_call.1} parent=11 // pred_check_branch
          %184 = sbr.rel (%p182) target = $region20
        $region19: #{tpu_custom_call.1} parent=11 // pred_region
          _
        $region20: #{tpu_custom_call.1} parent=11 // pred_fallthru
          _
        // Predicated region
        $region21: #{tpu_custom_call.1} parent=11 // pred_check
          %p185 = pneg %p107
        $region22: #{tpu_custom_call.1} parent=11 // pred_check_branch
          %187 = sbr.rel (%p185) target = $region24
        $region23: #{tpu_custom_call.1} parent=11 // pred_region
          %s189 = ssub.s32 8192, 8192
          %190 = vsyncadd [#allocation6], %s189
          %s191 = sshll.u32 [#allocation7], 4
          %s192 = int_to_ptr.vmem [resolvable:$true] %s191
          %197 = dma.hbm_to_vmem [thread:$0]  %s3, 8192, %s192, [#allocation6], 512, 512, 32
        $region24: #{tpu_custom_call.1} parent=11 // pred_fallthru
          _
        // Predicated region
        $region25: #{tpu_custom_call.1} parent=11 // pred_check
          %p198 = pneg %p128
        $region26: #{tpu_custom_call.1} parent=11 // pred_check_branch
          %200 = sbr.rel (%p198) target = $region28
        $region27: #{tpu_custom_call.1} parent=11 // pred_region
          _
        $region28: #{tpu_custom_call.1} parent=11 // pred_fallthru
          _
      $region12: #{tpu_custom_call.1} parent=5 // pred_fallthru
        _
      %p201 = scmp.lt.s32.totalorder %s18, 2
      // Predicated region
      $region29: #{tpu_custom_call.1} parent=5 // pred_check
        %p202 = pneg %p201
      $region30: #{tpu_custom_call.1} parent=5 // pred_check_branch
        %204 = sbr.rel (%p202) target = $region32
      $region31: #{tpu_custom_call.1} parent=5 // pred_region
        // Predicated region
        $region33: #{tpu_custom_call.1} parent=31 // pred_check
          %p205 = pneg %p38
        $region34: #{tpu_custom_call.1} parent=31 // pred_check_branch
          %207 = sbr.rel (%p205) target = $region36
        $region35: #{tpu_custom_call.1} parent=31 // pred_region
          %s208 = sand.u32 %s28, 1
          %s209 = scalar_lea.sflag [#allocation3], %s208
          %s210 = sand.u32 %s28, 1
          %s211 = smul.addr %s210, 8
          %s212 = scalar_lea.vmem [#allocation2], %s211
          %s214 = ssub.s32 128, 128
          %215 = vsyncadd %s209, %s214
          %s216 = smul.addr %s18, 128
          %s217 = scalar_lea.hbm %s0, %s216
          %s219 = sshll.u32 %s212, 4
          %s220 = int_to_ptr.vmem [resolvable:$true] %s219
          %222 = dma.hbm_to_vmem [thread:$0]  %s217, 128, %s220, %s209
        $region36: #{tpu_custom_call.1} parent=31 // pred_fallthru
          _
      $region32: #{tpu_custom_call.1} parent=5 // pred_fallthru
        _
      %p223 = scmp.le.s32.totalorder 1, %s18
      %p224 = scmp.lt.s32.totalorder %s18, 3
      %p225 = pnand %p223, %p224
      %p226 = pneg %p225
      // Predicated region
      $region37: #{tpu_custom_call.1} parent=5 // pred_check
        _
      $region38: #{tpu_custom_call.1} parent=5 // pred_check_branch
        %228 = sbr.rel (%p225) target = $region40
      $region39: #{tpu_custom_call.1} parent=5 // pred_region
        %s229 = ssub.s32 %s18, 1
        %s230 = sand.u32 %s31, 1
        %s231 = scalar_lea.sflag [#allocation3], %s230
        %s232 = sand.u32 %s31, 1
        %s233 = smul.addr %s232, 8
        %s234 = scalar_lea.vmem [#allocation2], %s233
        // Predicated region
        $region41: #{tpu_custom_call.1} parent=39 // pred_check
          %p235 = pneg %p44
        $region42: #{tpu_custom_call.1} parent=39 // pred_check_branch
          %237 = sbr.rel (%p235) target = $region44
        $region43: #{tpu_custom_call.1} parent=39 // pred_region
          %238 = dma.done %s231, 128
        $region44: #{tpu_custom_call.1} parent=39 // pred_fallthru
          _
        // Predicated region
        $region45: #{tpu_custom_call.1} parent=39 // pred_check
          %p239 = pneg %p65
        $region46: #{tpu_custom_call.1} parent=39 // pred_check_branch
          %241 = sbr.rel (%p239) target = $region48
        $region47: #{tpu_custom_call.1} parent=39 // pred_region
          %242 = dma.done [#allocation6], 8192
        $region48: #{tpu_custom_call.1} parent=39 // pred_fallthru
          _
        // Predicated region
        $region49: #{tpu_custom_call.1} parent=39 // pred_check
          %p243 = pneg %p107
        $region50: #{tpu_custom_call.1} parent=39 // pred_check_branch
          %245 = sbr.rel (%p243) target = $region52
        $region51: #{tpu_custom_call.1} parent=39 // pred_region
          %246 = dma.done [#allocation6], 8192
        $region52: #{tpu_custom_call.1} parent=39 // pred_fallthru
          _
        %s247 = sand.u32 %s31, 1
        %s248 = scalar_lea.sflag [#allocation3], %s247
        %s249 = sand.u32 %s31, 1
        %s250 = smul.addr %s249, 8
        %s251 = scalar_lea.vmem [#allocation2], %s250
        %p252 = pneg %p44
        %p253 = pneg %p41
        %p254 = pneg %p65
        %p255 = pneg %p62
        %p256 = pneg %p86
        %p257 = pneg %p83
        %p258 = pneg %p107
        %p259 = pneg %p104
        %p260 = pneg %p128
        %p261 = pneg %p125
        %p262 = pneg %p154
        %p263 = pneg %p151
        %s264 = sand.u32 %s141, 1
        %s265 = scalar_lea.sflag [#allocation4], %s264
        %s266 = sand.u32 %s141, 1
        %s267 = smul.addr %s266, 8
        %s268 = scalar_lea.vmem [#allocation8], %s267
        %v269 = vld [vmem:[%s234] sm:$0xff]
        %v270 = vld [vmem:[#allocation5] sm:$0xff]
        %v271 = vld [vmem:[#allocation5 + $0x8] sm:$0xff]
        %v272 = vld [vmem:[#allocation5 + $0x10] sm:$0xff]
        %v273 = vld [vmem:[#allocation5 + $0x18] sm:$0xff]
        %v274 = vld [vmem:[#allocation5 + $0x20] sm:$0xff]
        %v275 = vld [vmem:[#allocation5 + $0x28] sm:$0xff]
        %v276 = vld [vmem:[#allocation5 + $0x30] sm:$0xff]
        %v277 = vld [vmem:[#allocation5 + $0x38] sm:$0xff]
        %v278 = vld [vmem:[#allocation5 + $0x40] sm:$0xff]
        %v279 = vld [vmem:[#allocation5 + $0x48] sm:$0xff]
        %v280 = vld [vmem:[#allocation5 + $0x50] sm:$0xff]
        %v281 = vld [vmem:[#allocation5 + $0x58] sm:$0xff]
        %v282 = vld [vmem:[#allocation5 + $0x60] sm:$0xff]
        %v283 = vld [vmem:[#allocation5 + $0x68] sm:$0xff]
        %v284 = vld [vmem:[#allocation5 + $0x70] sm:$0xff]
        %v285 = vld [vmem:[#allocation5 + $0x78] sm:$0xff]
        %v286 = vld [vmem:[#allocation5 + $0x80] sm:$0xff]
        %v287 = vld [vmem:[#allocation5 + $0x88] sm:$0xff]
        %v288 = vld [vmem:[#allocation5 + $0x90] sm:$0xff]
        %v289 = vld [vmem:[#allocation5 + $0x98] sm:$0xff]
        %v290 = vld [vmem:[#allocation5 + $0xa0] sm:$0xff]
        %v291 = vld [vmem:[#allocation5 + $0xa8] sm:$0xff]
        %v292 = vld [vmem:[#allocation5 + $0xb0] sm:$0xff]
        %v293 = vld [vmem:[#allocation5 + $0xb8] sm:$0xff]
        %v294 = vld [vmem:[#allocation5 + $0xc0] sm:$0xff]
        %v295 = vld [vmem:[#allocation5 + $0xc8] sm:$0xff]
        %v296 = vld [vmem:[#allocation5 + $0xd0] sm:$0xff]
        %v297 = vld [vmem:[#allocation5 + $0xd8] sm:$0xff]
        %v298 = vld [vmem:[#allocation5 + $0xe0] sm:$0xff]
        %v299 = vld [vmem:[#allocation5 + $0xe8] sm:$0xff]
        %v300 = vld [vmem:[#allocation5 + $0xf0] sm:$0xff]
        %v301 = vld [vmem:[#allocation5 + $0xf8] sm:$0xff]
        %v302 = vld [vmem:[#allocation5 + $0x100] sm:$0xff]
        %v303 = vld [vmem:[#allocation5 + $0x108] sm:$0xff]
        %v304 = vld [vmem:[#allocation5 + $0x110] sm:$0xff]
        %v305 = vld [vmem:[#allocation5 + $0x118] sm:$0xff]
        %v306 = vld [vmem:[#allocation5 + $0x120] sm:$0xff]
        %v307 = vld [vmem:[#allocation5 + $0x128] sm:$0xff]
        %v308 = vld [vmem:[#allocation5 + $0x130] sm:$0xff]
        %v309 = vld [vmem:[#allocation5 + $0x138] sm:$0xff]
        %v310 = vld [vmem:[#allocation5 + $0x140] sm:$0xff]
        %v311 = vld [vmem:[#allocation5 + $0x148] sm:$0xff]
        %v312 = vld [vmem:[#allocation5 + $0x150] sm:$0xff]
        %v313 = vld [vmem:[#allocation5 + $0x158] sm:$0xff]
        %v314 = vld [vmem:[#allocation5 + $0x160] sm:$0xff]
        %v315 = vld [vmem:[#allocation5 + $0x168] sm:$0xff]
        %v316 = vld [vmem:[#allocation5 + $0x170] sm:$0xff]
        %v317 = vld [vmem:[#allocation5 + $0x178] sm:$0xff]
        %v318 = vld [vmem:[#allocation5 + $0x180] sm:$0xff]
        %v319 = vld [vmem:[#allocation5 + $0x188] sm:$0xff]
        %v320 = vld [vmem:[#allocation5 + $0x190] sm:$0xff]
        %v321 = vld [vmem:[#allocation5 + $0x198] sm:$0xff]
        %v322 = vld [vmem:[#allocation5 + $0x1a0] sm:$0xff]
        %v323 = vld [vmem:[#allocation5 + $0x1a8] sm:$0xff]
        %v324 = vld [vmem:[#allocation5 + $0x1b0] sm:$0xff]
        %v325 = vld [vmem:[#allocation5 + $0x1b8] sm:$0xff]
        %v326 = vld [vmem:[#allocation5 + $0x1c0] sm:$0xff]
        %v327 = vld [vmem:[#allocation5 + $0x1c8] sm:$0xff]
        %v328 = vld [vmem:[#allocation5 + $0x1d0] sm:$0xff]
        %v329 = vld [vmem:[#allocation5 + $0x1d8] sm:$0xff]
        %v330 = vld [vmem:[#allocation5 + $0x1e0] sm:$0xff]
        %v331 = vld [vmem:[#allocation5 + $0x1e8] sm:$0xff]
        %v332 = vld [vmem:[#allocation5 + $0x1f0] sm:$0xff]
        %v333 = vld [vmem:[#allocation5 + $0x1f8] sm:$0xff]
        %v334 = vld [vmem:[%s2] sm:$0xf]
        %v336 = vlaneseq
        %v337 = vshrl.u32 %v336, 7
        %v338 = vsub.s32 0, %v337
        %v339 = vrot.slane %v334, %v338
        %v340 = vlaneseq
        %v341 = vshrl.u32 %v340, 7
        %v342 = vsub.s32 1, %v341
        %v343 = vrot.slane %v334, %v342
        %v344 = vlaneseq
        %v345 = vshrl.u32 %v344, 7
        %v346 = vsub.s32 2, %v345
        %v347 = vrot.slane %v334, %v346
        %v348 = vlaneseq
        %v349 = vshrl.u32 %v348, 7
        %v350 = vsub.s32 3, %v349
        %v351 = vrot.slane %v334, %v350
        %356 = vmatprep.subr.mxu0 0.0
        %357 = vmatpush1.xpose.msra.mxu0 %v270
        %358 = vmatprep.subr.mxu0 0.0
        %359 = vmatpush1.xpose.msra.mxu0 %v271
        %360 = vmatprep.subr.mxu0 0.0
        %361 = vmatpush1.xpose.msra.mxu0 %v272
        %362 = vmatprep.subr.mxu0 0.0
        %363 = vmatpush1.xpose.msra.mxu0 %v273
        %364 = vmatprep.subr.mxu0 0.0
        %365 = vmatpush1.xpose.msra.mxu0 %v274
        %366 = vmatprep.subr.mxu0 0.0
        %367 = vmatpush1.xpose.msra.mxu0 %v275
        %368 = vmatprep.subr.mxu0 0.0
        %369 = vmatpush1.xpose.msra.mxu0 %v276
        %370 = vmatprep.subr.mxu0 0.0
        %371 = vmatpush1.xpose.msra.mxu0 %v277
        %372 = vmatprep.subr.mxu0 0.0
        %373 = vmatpush1.xpose.msra.mxu0 %v278
        %374 = vmatprep.subr.mxu0 0.0
        %375 = vmatpush1.xpose.msra.mxu0 %v279
        %376 = vmatprep.subr.mxu0 0.0
        %377 = vmatpush1.xpose.msra.mxu0 %v280
        %378 = vmatprep.subr.mxu0 0.0
        %379 = vmatpush1.xpose.msra.mxu0 %v281
        %380 = vmatprep.subr.mxu0 0.0
        %381 = vmatpush1.xpose.msra.mxu0 %v282
        %382 = vmatprep.subr.mxu0 0.0
        %383 = vmatpush1.xpose.msra.mxu0 %v283
        %384 = vmatprep.subr.mxu0 0.0
        %385 = vmatpush1.xpose.msra.mxu0 %v284
        %386 = vmatprep.subr.mxu0 0.0
        %387 = vmatpush1.xpose.msra.mxu0 %v285
        %388 = vmatprep.subr.mxu0 0.0
        %389 = vmatpush1.xpose.msra.mxu0 %v286
        %390 = vmatprep.subr.mxu0 0.0
        %391 = vmatpush1.xpose.msra.mxu0 %v287
        %392 = vmatprep.subr.mxu0 0.0
        %393 = vmatpush1.xpose.msra.mxu0 %v288
        %394 = vmatprep.subr.mxu0 0.0
        %395 = vmatpush1.xpose.msra.mxu0 %v289
        %396 = vmatprep.subr.mxu0 0.0
        %397 = vmatpush1.xpose.msra.mxu0 %v290
        %398 = vmatprep.subr.mxu0 0.0
        %399 = vmatpush1.xpose.msra.mxu0 %v291
        %400 = vmatprep.subr.mxu0 0.0
        %401 = vmatpush1.xpose.msra.mxu0 %v292
        %402 = vmatprep.subr.mxu0 0.0
        %403 = vmatpush1.xpose.msra.mxu0 %v293
        %404 = vmatprep.subr.mxu0 0.0
        %405 = vmatpush1.xpose.msra.mxu0 %v294
        %406 = vmatprep.subr.mxu0 0.0
        %407 = vmatpush1.xpose.msra.mxu0 %v295
        %408 = vmatprep.subr.mxu0 0.0
        %409 = vmatpush1.xpose.msra.mxu0 %v296
        %410 = vmatprep.subr.mxu0 0.0
        %411 = vmatpush1.xpose.msra.mxu0 %v297
        %412 = vmatprep.subr.mxu0 0.0
        %413 = vmatpush1.xpose.msra.mxu0 %v298
        %414 = vmatprep.subr.mxu0 0.0
        %415 = vmatpush1.xpose.msra.mxu0 %v299
        %416 = vmatprep.subr.mxu0 0.0
        %417 = vmatpush1.xpose.msra.mxu0 %v300
        %418 = vmatprep.subr.mxu0 0.0
        %419 = vmatpush1.xpose.msra.mxu0 %v301
        %420 = vmatprep.mubr.f32.mxu0 0.0
        %421 = vmatmul.mubr.f32.gmra.mrb[0].mxu0 %v269
        %v422 = vpop.f32.mrb[0].mxu0
        %v423 = vadd.f32 %v339, %v422
        %v424 = vpop.f32.mrb[0].mxu0
        %v425 = vadd.f32 %v343, %v424
        %426 = vdwg.mxu0
        %427 = vmatprep.subr.mxu0 0.0
        %428 = vmatpush1.xpose.msra.mxu0 %v302
        %429 = vmatprep.subr.mxu0 0.0
        %430 = vmatpush1.xpose.msra.mxu0 %v303
        %431 = vmatprep.subr.mxu0 0.0
        %432 = vmatpush1.xpose.msra.mxu0 %v304
        %433 = vmatprep.subr.mxu0 0.0
        %434 = vmatpush1.xpose.msra.mxu0 %v305
        %435 = vmatprep.subr.mxu0 0.0
        %436 = vmatpush1.xpose.msra.mxu0 %v306
        %437 = vmatprep.subr.mxu0 0.0
        %438 = vmatpush1.xpose.msra.mxu0 %v307
        %439 = vmatprep.subr.mxu0 0.0
        %440 = vmatpush1.xpose.msra.mxu0 %v308
        %441 = vmatprep.subr.mxu0 0.0
        %442 = vmatpush1.xpose.msra.mxu0 %v309
        %443 = vmatprep.subr.mxu0 0.0
        %444 = vmatpush1.xpose.msra.mxu0 %v310
        %445 = vmatprep.subr.mxu0 0.0
        %446 = vmatpush1.xpose.msra.mxu0 %v311
        %447 = vmatprep.subr.mxu0 0.0
        %448 = vmatpush1.xpose.msra.mxu0 %v312
        %449 = vmatprep.subr.mxu0 0.0
        %450 = vmatpush1.xpose.msra.mxu0 %v313
        %451 = vmatprep.subr.mxu0 0.0
        %452 = vmatpush1.xpose.msra.mxu0 %v314
        %453 = vmatprep.subr.mxu0 0.0
        %454 = vmatpush1.xpose.msra.mxu0 %v315
        %455 = vmatprep.subr.mxu0 0.0
        %456 = vmatpush1.xpose.msra.mxu0 %v316
        %457 = vmatprep.subr.mxu0 0.0
        %458 = vmatpush1.xpose.msra.mxu0 %v317
        %459 = vmatprep.subr.mxu0 0.0
        %460 = vmatpush1.xpose.msra.mxu0 %v318
        %461 = vmatprep.subr.mxu0 0.0
        %462 = vmatpush1.xpose.msra.mxu0 %v319
        %463 = vmatprep.subr.mxu0 0.0
        %464 = vmatpush1.xpose.msra.mxu0 %v320
        %465 = vmatprep.subr.mxu0 0.0
        %466 = vmatpush1.xpose.msra.mxu0 %v321
        %467 = vmatprep.subr.mxu0 0.0
        %468 = vmatpush1.xpose.msra.mxu0 %v322
        %469 = vmatprep.subr.mxu0 0.0
        %470 = vmatpush1.xpose.msra.mxu0 %v323
        %471 = vmatprep.subr.mxu0 0.0
        %472 = vmatpush1.xpose.msra.mxu0 %v324
        %473 = vmatprep.subr.mxu0 0.0
        %474 = vmatpush1.xpose.msra.mxu0 %v325
        %475 = vmatprep.subr.mxu0 0.0
        %476 = vmatpush1.xpose.msra.mxu0 %v326
        %477 = vmatprep.subr.mxu0 0.0
        %478 = vmatpush1.xpose.msra.mxu0 %v327
        %479 = vmatprep.subr.mxu0 0.0
        %480 = vmatpush1.xpose.msra.mxu0 %v328
        %481 = vmatprep.subr.mxu0 0.0
        %482 = vmatpush1.xpose.msra.mxu0 %v329
        %483 = vmatprep.subr.mxu0 0.0
        %484 = vmatpush1.xpose.msra.mxu0 %v330
        %485 = vmatprep.subr.mxu0 0.0
        %486 = vmatpush1.xpose.msra.mxu0 %v331
        %487 = vmatprep.subr.mxu0 0.0
        %488 = vmatpush1.xpose.msra.mxu0 %v332
        %489 = vmatprep.subr.mxu0 0.0
        %490 = vmatpush1.xpose.msra.mxu0 %v333
        %491 = vmatprep.mubr.f32.mxu0 0.0
        %492 = vmatmul.mubr.f32.gmra.mrb[0].mxu0 %v269
        %v493 = vpop.f32.mrb[0].mxu0
        %v494 = vadd.f32 %v347, %v493
        %v495 = vpop.f32.mrb[0].mxu0
        %v496 = vadd.f32 %v351, %v495
        %497 = vdwg.mxu0
        %v498 = vmax.f32 %v423, 0.0
        %v499 = vmax.f32 %v425, 0.0
        %v500 = vmax.f32 %v494, 0.0
        %v501 = vmax.f32 %v496, 0.0
        %v502 = vld [vmem:[#allocation7] sm:$0xff]
        %v503 = vld [vmem:[#allocation7 + $0x8] sm:$0xff]
        %v504 = vld [vmem:[#allocation7 + $0x10] sm:$0xff]
        %v505 = vld [vmem:[#allocation7 + $0x18] sm:$0xff]
        %v506 = vld [vmem:[#allocation7 + $0x20] sm:$0xff]
        %v507 = vld [vmem:[#allocation7 + $0x28] sm:$0xff]
        %v508 = vld [vmem:[#allocation7 + $0x30] sm:$0xff]
        %v509 = vld [vmem:[#allocation7 + $0x38] sm:$0xff]
        %v510 = vld [vmem:[#allocation7 + $0x40] sm:$0xff]
        %v511 = vld [vmem:[#allocation7 + $0x48] sm:$0xff]
        %v512 = vld [vmem:[#allocation7 + $0x50] sm:$0xff]
        %v513 = vld [vmem:[#allocation7 + $0x58] sm:$0xff]
        %v514 = vld [vmem:[#allocation7 + $0x60] sm:$0xff]
        %v515 = vld [vmem:[#allocation7 + $0x68] sm:$0xff]
        %v516 = vld [vmem:[#allocation7 + $0x70] sm:$0xff]
        %v517 = vld [vmem:[#allocation7 + $0x78] sm:$0xff]
        %v518 = vld [vmem:[#allocation7 + $0x80] sm:$0xff]
        %v519 = vld [vmem:[#allocation7 + $0x88] sm:$0xff]
        %v520 = vld [vmem:[#allocation7 + $0x90] sm:$0xff]
        %v521 = vld [vmem:[#allocation7 + $0x98] sm:$0xff]
        %v522 = vld [vmem:[#allocation7 + $0xa0] sm:$0xff]
        %v523 = vld [vmem:[#allocation7 + $0xa8] sm:$0xff]
        %v524 = vld [vmem:[#allocation7 + $0xb0] sm:$0xff]
        %v525 = vld [vmem:[#allocation7 + $0xb8] sm:$0xff]
        %v526 = vld [vmem:[#allocation7 + $0xc0] sm:$0xff]
        %v527 = vld [vmem:[#allocation7 + $0xc8] sm:$0xff]
        %v528 = vld [vmem:[#allocation7 + $0xd0] sm:$0xff]
        %v529 = vld [vmem:[#allocation7 + $0xd8] sm:$0xff]
        %v530 = vld [vmem:[#allocation7 + $0xe0] sm:$0xff]
        %v531 = vld [vmem:[#allocation7 + $0xe8] sm:$0xff]
        %v532 = vld [vmem:[#allocation7 + $0xf0] sm:$0xff]
        %v533 = vld [vmem:[#allocation7 + $0xf8] sm:$0xff]
        %v534 = vld [vmem:[#allocation7 + $0x100] sm:$0xff]
        %v535 = vld [vmem:[#allocation7 + $0x108] sm:$0xff]
        %v536 = vld [vmem:[#allocation7 + $0x110] sm:$0xff]
        %v537 = vld [vmem:[#allocation7 + $0x118] sm:$0xff]
        %v538 = vld [vmem:[#allocation7 + $0x120] sm:$0xff]
        %v539 = vld [vmem:[#allocation7 + $0x128] sm:$0xff]
        %v540 = vld [vmem:[#allocation7 + $0x130] sm:$0xff]
        %v541 = vld [vmem:[#allocation7 + $0x138] sm:$0xff]
        %v542 = vld [vmem:[#allocation7 + $0x140] sm:$0xff]
        %v543 = vld [vmem:[#allocation7 + $0x148] sm:$0xff]
        %v544 = vld [vmem:[#allocation7 + $0x150] sm:$0xff]
        %v545 = vld [vmem:[#allocation7 + $0x158] sm:$0xff]
        %v546 = vld [vmem:[#allocation7 + $0x160] sm:$0xff]
        %v547 = vld [vmem:[#allocation7 + $0x168] sm:$0xff]
        %v548 = vld [vmem:[#allocation7 + $0x170] sm:$0xff]
        %v549 = vld [vmem:[#allocation7 + $0x178] sm:$0xff]
        %v550 = vld [vmem:[#allocation7 + $0x180] sm:$0xff]
        %v551 = vld [vmem:[#allocation7 + $0x188] sm:$0xff]
        %v552 = vld [vmem:[#allocation7 + $0x190] sm:$0xff]
        %v553 = vld [vmem:[#allocation7 + $0x198] sm:$0xff]
        %v554 = vld [vmem:[#allocation7 + $0x1a0] sm:$0xff]
        %v555 = vld [vmem:[#allocation7 + $0x1a8] sm:$0xff]
        %v556 = vld [vmem:[#allocation7 + $0x1b0] sm:$0xff]
        %v557 = vld [vmem:[#allocation7 + $0x1b8] sm:$0xff]
        %v558 = vld [vmem:[#allocation7 + $0x1c0] sm:$0xff]
        %v559 = vld [vmem:[#allocation7 + $0x1c8] sm:$0xff]
        %v560 = vld [vmem:[#allocation7 + $0x1d0] sm:$0xff]
        %v561 = vld [vmem:[#allocation7 + $0x1d8] sm:$0xff]
        %v562 = vld [vmem:[#allocation7 + $0x1e0] sm:$0xff]
        %v563 = vld [vmem:[#allocation7 + $0x1e8] sm:$0xff]
        %v564 = vld [vmem:[#allocation7 + $0x1f0] sm:$0xff]
        %v565 = vld [vmem:[#allocation7 + $0x1f8] sm:$0xff]
        %v566 = vld [vmem:[%s4] sm:$0x1]
        %v568 = vlaneseq
        %v569 = vshrl.u32 %v568, 7
        %v570 = vsub.s32 0, %v569
        %v571 = vrot.slane %v566, %v570
        %573 = vmatprep.subr.mxu0 %v503
        %574 = vmatpush1.xpose.msra.mxu0 %v502
        %575 = vmatprep.subr.mxu0 %v507
        %576 = vmatpush1.xpose.msra.mxu0 %v506
        %577 = vmatprep.subr.mxu0 %v511
        %578 = vmatpush1.xpose.msra.mxu0 %v510
        %579 = vmatprep.subr.mxu0 %v515
        %580 = vmatpush1.xpose.msra.mxu0 %v514
        %581 = vmatprep.subr.mxu0 %v519
        %582 = vmatpush1.xpose.msra.mxu0 %v518
        %583 = vmatprep.subr.mxu0 %v523
        %584 = vmatpush1.xpose.msra.mxu0 %v522
        %585 = vmatprep.subr.mxu0 %v527
        %586 = vmatpush1.xpose.msra.mxu0 %v526
        %587 = vmatprep.subr.mxu0 %v531
        %588 = vmatpush1.xpose.msra.mxu0 %v530
        %589 = vmatprep.subr.mxu0 %v535
        %590 = vmatpush1.xpose.msra.mxu0 %v534
        %591 = vmatprep.subr.mxu0 %v539
        %592 = vmatpush1.xpose.msra.mxu0 %v538
        %593 = vmatprep.subr.mxu0 %v543
        %594 = vmatpush1.xpose.msra.mxu0 %v542
        %595 = vmatprep.subr.mxu0 %v547
        %596 = vmatpush1.xpose.msra.mxu0 %v546
        %597 = vmatprep.subr.mxu0 %v551
        %598 = vmatpush1.xpose.msra.mxu0 %v550
        %599 = vmatprep.subr.mxu0 %v555
        %600 = vmatpush1.xpose.msra.mxu0 %v554
        %601 = vmatprep.subr.mxu0 %v559
        %602 = vmatpush1.xpose.msra.mxu0 %v558
        %603 = vmatprep.subr.mxu0 %v563
        %604 = vmatpush1.xpose.msra.mxu0 %v562
        %605 = vmatprep.subr.mxu0 0.0
        %606 = vmatpush1.xpose.msra.mxu0 0.0
        %607 = vmatprep.subr.mxu0 0.0
        %608 = vmatpush1.xpose.msra.mxu0 0.0
        %609 = vmatprep.subr.mxu0 0.0
        %610 = vmatpush1.xpose.msra.mxu0 0.0
        %611 = vmatprep.subr.mxu0 0.0
        %612 = vmatpush1.xpose.msra.mxu0 0.0
        %613 = vmatprep.subr.mxu0 0.0
        %614 = vmatpush1.xpose.msra.mxu0 0.0
        %615 = vmatprep.subr.mxu0 0.0
        %616 = vmatpush1.xpose.msra.mxu0 0.0
        %617 = vmatprep.subr.mxu0 0.0
        %618 = vmatpush1.xpose.msra.mxu0 0.0
        %619 = vmatprep.subr.mxu0 0.0
        %620 = vmatpush1.xpose.msra.mxu0 0.0
        %621 = vmatprep.subr.mxu0 0.0
        %622 = vmatpush1.xpose.msra.mxu0 0.0
        %623 = vmatprep.subr.mxu0 0.0
        %624 = vmatpush1.xpose.msra.mxu0 0.0
        %625 = vmatprep.subr.mxu0 0.0
        %626 = vmatpush1.xpose.msra.mxu0 0.0
        %627 = vmatprep.subr.mxu0 0.0
        %628 = vmatpush1.xpose.msra.mxu0 0.0
        %629 = vmatprep.subr.mxu0 0.0
        %630 = vmatpush1.xpose.msra.mxu0 0.0
        %631 = vmatprep.subr.mxu0 0.0
        %632 = vmatpush1.xpose.msra.mxu0 0.0
        %633 = vmatprep.subr.mxu0 0.0
        %634 = vmatpush1.xpose.msra.mxu0 0.0
        %635 = vmatprep.subr.mxu0 0.0
        %636 = vmatpush1.xpose.msra.mxu0 0.0
        %637 = vmatprep.mubr.f32.mxu0 %v499
        %638 = vmatmul.mubr.f32.gmra.mrb[0].mxu0 %v498
        %v639 = vpop.f32.mrb[0].mxu0
        %v640 = vadd.f32 %v571, %v639
        %v641 = vpop.f32.mrb[0].mxu0
        %642 = vdwg.mxu0
        %643 = vmatprep.subr.mxu0 %v505
        %644 = vmatpush1.xpose.msra.mxu0 %v504
        %645 = vmatprep.subr.mxu0 %v509
        %646 = vmatpush1.xpose.msra.mxu0 %v508
        %647 = vmatprep.subr.mxu0 %v513
        %648 = vmatpush1.xpose.msra.mxu0 %v512
        %649 = vmatprep.subr.mxu0 %v517
        %650 = vmatpush1.xpose.msra.mxu0 %v516
        %651 = vmatprep.subr.mxu0 %v521
        %652 = vmatpush1.xpose.msra.mxu0 %v520
        %653 = vmatprep.subr.mxu0 %v525
        %654 = vmatpush1.xpose.msra.mxu0 %v524
        %655 = vmatprep.subr.mxu0 %v529
        %656 = vmatpush1.xpose.msra.mxu0 %v528
        %657 = vmatprep.subr.mxu0 %v533
        %658 = vmatpush1.xpose.msra.mxu0 %v532
        %659 = vmatprep.subr.mxu0 %v537
        %660 = vmatpush1.xpose.msra.mxu0 %v536
        %661 = vmatprep.subr.mxu0 %v541
        %662 = vmatpush1.xpose.msra.mxu0 %v540
        %663 = vmatprep.subr.mxu0 %v545
        %664 = vmatpush1.xpose.msra.mxu0 %v544
        %665 = vmatprep.subr.mxu0 %v549
        %666 = vmatpush1.xpose.msra.mxu0 %v548
        %667 = vmatprep.subr.mxu0 %v553
        %668 = vmatpush1.xpose.msra.mxu0 %v552
        %669 = vmatprep.subr.mxu0 %v557
        %670 = vmatpush1.xpose.msra.mxu0 %v556
        %671 = vmatprep.subr.mxu0 %v561
        %672 = vmatpush1.xpose.msra.mxu0 %v560
        %673 = vmatprep.subr.mxu0 %v565
        %674 = vmatpush1.xpose.msra.mxu0 %v564
        %675 = vmatprep.subr.mxu0 0.0
        %676 = vmatpush1.xpose.msra.mxu0 0.0
        %677 = vmatprep.subr.mxu0 0.0
        %678 = vmatpush1.xpose.msra.mxu0 0.0
        %679 = vmatprep.subr.mxu0 0.0
        %680 = vmatpush1.xpose.msra.mxu0 0.0
        %681 = vmatprep.subr.mxu0 0.0
        %682 = vmatpush1.xpose.msra.mxu0 0.0
        %683 = vmatprep.subr.mxu0 0.0
        %684 = vmatpush1.xpose.msra.mxu0 0.0
        %685 = vmatprep.subr.mxu0 0.0
        %686 = vmatpush1.xpose.msra.mxu0 0.0
        %687 = vmatprep.subr.mxu0 0.0
        %688 = vmatpush1.xpose.msra.mxu0 0.0
        %689 = vmatprep.subr.mxu0 0.0
        %690 = vmatpush1.xpose.msra.mxu0 0.0
        %691 = vmatprep.subr.mxu0 0.0
        %692 = vmatpush1.xpose.msra.mxu0 0.0
        %693 = vmatprep.subr.mxu0 0.0
        %694 = vmatpush1.xpose.msra.mxu0 0.0
        %695 = vmatprep.subr.mxu0 0.0
        %696 = vmatpush1.xpose.msra.mxu0 0.0
        %697 = vmatprep.subr.mxu0 0.0
        %698 = vmatpush1.xpose.msra.mxu0 0.0
        %699 = vmatprep.subr.mxu0 0.0
        %700 = vmatpush1.xpose.msra.mxu0 0.0
        %701 = vmatprep.subr.mxu0 0.0
        %702 = vmatpush1.xpose.msra.mxu0 0.0
        %703 = vmatprep.subr.mxu0 0.0
        %704 = vmatpush1.xpose.msra.mxu0 0.0
        %705 = vmatprep.subr.mxu0 0.0
        %706 = vmatpush1.xpose.msra.mxu0 0.0
        %707 = vmatprep.mubr.f32.mxu0 %v501
        %708 = vmatmul.mubr.f32.gmra.mrb[0].mxu0 %v500
        %v709 = vpop.f32.mrb[0].mxu0
        %v710 = vadd.f32 %v640, %v709
        %v711 = vpop.f32.mrb[0].mxu0
        %712 = vdwg.mxu0
        %713 = vst [vmem:[%s268] sm:$0xff] %v710
        %s714 = sand.u32 %s141, 1
        %s715 = scalar_lea.sflag [#allocation4], %s714
        %s716 = sand.u32 %s141, 1
        %s717 = smul.addr %s716, 8
        %s718 = scalar_lea.vmem [#allocation8], %s717
        // Predicated region
        $region53: #{tpu_custom_call.1} parent=39 // pred_check
          %p719 = pneg %p151
        $region54: #{tpu_custom_call.1} parent=39 // pred_check_branch
          %721 = sbr.rel (%p719) target = $region56
        $region55: #{tpu_custom_call.1} parent=39 // pred_region
          %s723 = ssub.s32 128, 128
          %724 = vsyncadd %s715, %s723
          %s725 = smul.addr %s23, 128
          %s726 = scalar_lea.hbm %s5, %s725
          %s728 = sshll.u32 %s718, 4
          %s729 = int_to_ptr.vmem [resolvable:$true] %s728
          %731 = dma.vmem_to_hbm [thread:$0]  %s729, 128, %s726, %s715
        $region56: #{tpu_custom_call.1} parent=39 // pred_fallthru
          _
      $region40: #{tpu_custom_call.1} parent=5 // pred_fallthru
        _
      %p732 = scmp.le.s32.totalorder 2, %s18
      // Predicated region
      $region57: #{tpu_custom_call.1} parent=5 // pred_check
        %p733 = pneg %p732
      $region58: #{tpu_custom_call.1} parent=5 // pred_check_branch
        %735 = sbr.rel (%p733) target = $region60
      $region59: #{tpu_custom_call.1} parent=5 // pred_region
        %s736 = ssub.s32 %s18, 2
        // Predicated region
        $region61: #{tpu_custom_call.1} parent=59 // pred_check
          %p737 = pneg %p157
        $region62: #{tpu_custom_call.1} parent=59 // pred_check_branch
          %739 = sbr.rel (%p737) target = $region64
        $region63: #{tpu_custom_call.1} parent=59 // pred_region
          %s740 = sand.u32 %s142, 1
          %s741 = scalar_lea.sflag [#allocation4], %s740
          %s742 = sand.u32 %s142, 1
          %s743 = smul.addr %s742, 8
          %s744 = scalar_lea.vmem [#allocation8], %s743
          %745 = dma.done %s741, 128
        $region64: #{tpu_custom_call.1} parent=59 // pred_fallthru
          _
      $region60: #{tpu_custom_call.1} parent=5 // pred_fallthru
        _
    $region6: #{tpu_custom_call.1} parent=1 // loop_footer
      %s22 = sadd.s32 1, %s18
    $region7: #{tpu_custom_call.1} parent=1 // loop_footer_branch
      %17 = sbr.rel target = $region3
    $region8: #{tpu_custom_call.1} parent=1 // loop_exit
      _
    %746 = vsyncpa [#allocation3], 1
    %s747 = scalar_lea.sflag [#allocation3], 1
    %748 = vsyncpa %s747, 1
    %749 = vsyncpa [#allocation6], 1
    %750 = vsyncpa [#allocation4], 1
    %s751 = scalar_lea.sflag [#allocation4], 1
    %752 = vsyncpa %s751, 1

</llo_original>
